<compile_context>
chip_gen: v5e
topology: v5e:2x2
jax: 0.10.0
libtpu: 0.0.40
codegen_flags: <defaults>
</compile_context>

<pallas_src>
import numpy as np
import jax
import jax.numpy as jnp
from jax.experimental import pallas as pl
from jax.experimental.pallas import tpu as pltpu

K = 3                    # conv kernel size
PAD = (K - 1) // 2       # = 1
LANE = 128


def _round_up(a, b):
    return (a + b - 1) // b * b


def _tpu_caps():
    """(vmem_capacity_bytes, tensorcores_per_chip) with safe fallbacks."""
    vmem_cap = None
    num_tc = 1
    try:
        info = pltpu.get_tpu_info()
        vmem_cap = int(getattr(info, "vmem_capacity_bytes", 0)) or None
    except Exception:
        vmem_cap = None
    kind = ""
    try:
        kind = jax.devices()[0].device_kind.lower()
    except Exception:
        pass
    if "v7" in kind:
        num_tc = 2
    if vmem_cap is None:
        vmem_cap = (64 << 20) if "v7" in kind else (128 << 20)
    return vmem_cap, num_tc


def _pick_batch_tile(n, per_image_bytes, vmem_cap, num_tc):
    """Largest batch tile dividing n whose block fits the generation-aware target.
    On multi-TC chips prefer a tile whose step count is divisible by the TC count."""
    target = int(min(8 << 20, max(2 << 20, vmem_cap // 16)))
    fit = max(1, target // max(1, per_image_bytes))
    divs = [d for d in range(1, n + 1) if n % d == 0 and d <= fit] or [1]
    if num_tc > 1 and n >= num_tc:
        balanced = [d for d in divs if (n // d) % num_tc == 0]
        if balanced:
            return max(balanced)
    return max(divs)


def _border_masks(H, W, hw_pad):
    """(K*K, hw_pad) f32 validity mask per conv tap on the flattened H*W axis."""
    hw = H * W
    hh = np.arange(hw) // W
    ww = np.arange(hw) % W
    rows = []
    for kh in range(K):
        for kw in range(K):
            dh, dw = kh - PAD, kw - PAD
            valid = ((hh + dh >= 0) & (hh + dh < H) &
                     (ww + dw >= 0) & (ww + dw < W))
            rows.append(valid)
    m = np.stack(rows).astype(np.float32)                 # (K*K, hw)
    if hw_pad > hw:
        m = np.pad(m, ((0, 0), (0, hw_pad - hw)))
    return m


def spatial_attn(x, w):
    """x: (N, C, H, W); w: Conv2d(2, 1, K, K) weight, shape (1, 2, K, K)."""
    N, C, H, W = x.shape
    HW = H * W
    HW_pad = _round_up(HW, LANE)                    # lane-dense last dim
    bpe = jnp.dtype(x.dtype).itemsize

    x2 = x.reshape(N, C, HW)
    if HW_pad != HW:
        x2 = jnp.pad(x2, ((0, 0), (0, 0), (0, HW_pad - HW)))

    w_flat = w.reshape(-1).astype(jnp.float32)                  # (2*K*K,) -> SMEM
    mask = jnp.asarray(_border_masks(H, W, HW_pad))             # (K*K, HW_pad) -> VMEM

    vmem_cap, num_tc = _tpu_caps()
    sub = 8 * max(1, 4 // bpe)                      # sublane tile: 8/f32, 16/bf16
    padded_C = _round_up(C, sub)
    per_image = padded_C * HW_pad * bpe             # VMEM footprint incl. sublane pad
    b_tile = _pick_batch_tile(N, per_image, vmem_cap, num_tc)
    # TODO(synk): add an inner C/HW tiling path for shapes where a single image's
    #             block exceeds the VMEM budget (b_tile=1 still too large).

    block_bytes = b_tile * per_image
    temp_bytes = 8 * b_tile * HW_pad * 4 + K * K * HW_pad * 4   # f32 temps + masks
    need = 4 * block_bytes + temp_bytes + (4 << 20)             # 2x in + 2x out bufs
    vmem_limit = int(min(int(vmem_cap * 0.75), max(need, 16 << 20)))

    def kernel(w_ref, mask_ref, x_ref, o_ref):
        # ---- ChannelPool: chunked max/sum over channels, read per-channel from
        # x_ref (cross-vreg VPU ops, no full-block f32 copy, no sublane XLU reduce)
        x0 = x_ref[:, 0, :].astype(jnp.float32)        # (b_tile, HW_pad)
        mx = x0
        sm = x0
        for c in range(1, C):
            xc = x_ref[:, c, :].astype(jnp.float32)
            mx = jnp.maximum(mx, xc)
            sm = sm + xc
        mean = sm * (1.0 / C)

        # Hoist the 18 conv weights (SMEM scalar reads) out of the tap loop.
        wv = [w_ref[i] for i in range(2 * K * K)]

        # ---- 3x3 zero-padded conv: per tap, combine the two pooled channels with
        # their weights first (shift is linear), then ONE roll + ONE mask multiply.
        acc = None
        for t in range(K * K):
            kh, kw = t // K, t % K
            dh, dw = kh - PAD, kw - PAD
            s = dh * W + dw                            # shift in flattened coords
            combined = mx * wv[t] + mean * wv[K * K + t]
            shifted = (pltpu.roll(combined, shift=(-s) % HW_pad, axis=1)
                       if s != 0 else combined)
            if s == 0 and HW_pad == HW:
                term = shifted                         # center tap: mask all-ones
            else:
                term = shifted * mask_ref[pl.ds(t, 1), :]
            acc = term if acc is None else acc + term

        scale = jax.nn.sigmoid(acc).astype(o_ref.dtype)   # (b_tile, HW_pad)

        # Dominant read-scale-write pass stays in the input dtype (bf16-friendly).
        o_ref[...] = x_ref[...] * scale[:, None, :]

    out2 = pl.pallas_call(
        kernel,
        out_shape=jax.ShapeDtypeStruct((N, C, HW_pad), x.dtype),
        grid=(N // b_tile,),
        in_specs=[
            pl.BlockSpec(memory_space=pltpu.MemorySpace.SMEM),          # conv weights
            pl.BlockSpec((K * K, HW_pad), lambda b: (0, 0)),            # border masks
            pl.BlockSpec((b_tile, C, HW_pad), lambda b: (b, 0, 0)),     # x (lane-dense)
        ],
        out_specs=pl.BlockSpec((b_tile, C, HW_pad), lambda b: (b, 0, 0)),
        compiler_params=pltpu.CompilerParams(
            dimension_semantics=("parallel",),
            vmem_limit_bytes=vmem_limit,
        ),
    )(w_flat, mask, x2)

    if HW_pad != HW:
        out2 = out2[..., :HW]
    return out2.reshape(N, C, H, W)


def reference(x, w):
    """Pure-JAX reference matching the PyTorch forward exactly."""
    mx = jnp.max(x, axis=1, keepdims=True)
    mn = jnp.mean(x, axis=1, keepdims=True)
    pooled = jnp.concatenate([mx, mn], axis=1)      # (N, 2, H, W)
    conv = jax.lax.conv_general_dilated(
        pooled, w, window_strides=(1, 1),
        padding=((PAD, PAD), (PAD, PAD)),
        dimension_numbers=("NCHW", "OIHW", "NCHW"))
    return x * jax.nn.sigmoid(conv)


if __name__ == "__main__":
    key = jax.random.PRNGKey(0)
    kx, kw = jax.random.split(key)

    N, C, H, W = 2, 4, 16, 16
    x = jax.random.normal(kx, (N, C, H, W), dtype=jnp.float32)

    # Deterministic Conv2d(2, 1, 3, bias=False) weight init (kaiming-uniform-style bound).
    fan_in = 2 * K * K
    bound = 1.0 / np.sqrt(fan_in)
    w = jax.random.uniform(kw, (1, 2, K, K), dtype=jnp.float32,
                           minval=-bound, maxval=bound)

    out = spatial_attn(x, w)
    out = jax.block_until_ready(out)

    ref = reference(x, w)
    assert out.shape == x.shape and out.dtype == x.dtype
    assert jnp.allclose(out, ref, atol=1e-5, rtol=1e-5), float(jnp.max(jnp.abs(out - ref)))

    print("KERNEL_OK")
</pallas_src>

<mosaic_0001>
module attributes {stable_mosaic.version = 11 : i64} {
  func.func @kernel(%arg0: i32, %arg1: memref<18xf32, #tpu.memory_space<smem>>, %arg2: memref<9x256xf32, #tpu.memory_space<vmem>>, %arg3: memref<2x4x256xf32, #tpu.memory_space<vmem>>, %arg4: memref<2x4x256xf32, #tpu.memory_space<vmem>>) attributes {dimension_semantics = [#tpu.dimension_semantics<parallel>], iteration_bounds = array<i64: 1>, scalar_prefetch = 0 : i64, scratch_operands = 0 : i64, tpu.core_type = #tpu.core_type<tc>, window_params = [{transform_indices = @transform_0, window_bounds = array<i64: 18>}, {pipeline_mode = #tpu.pipeline_mode<synchronous>, transform_indices = @transform_1, window_bounds = array<i64: 9, 256>}, {transform_indices = @transform_2, window_bounds = array<i64: 2, 4, 256>}, {transform_indices = @transform_3, window_bounds = array<i64: 2, 4, 256>}]} {
    %c0 = arith.constant 0 : index
    %c0_0 = arith.constant 0 : index
    %c0_1 = arith.constant 0 : index
    %0 = vector.load %arg3[%c0, %c0_0, %c0_1] : memref<2x4x256xf32, #tpu.memory_space<vmem>>, vector<2x1x256xf32>
    %1 = vector.shape_cast %0 : vector<2x1x256xf32> to vector<2x256xf32>
    %c0_2 = arith.constant 0 : index
    %c1 = arith.constant 1 : index
    %c0_3 = arith.constant 0 : index
    %2 = vector.load %arg3[%c0_2, %c1, %c0_3] : memref<2x4x256xf32, #tpu.memory_space<vmem>>, vector<2x1x256xf32>
    %3 = vector.shape_cast %2 : vector<2x1x256xf32> to vector<2x256xf32>
    %4 = arith.maximumf %1, %3 : vector<2x256xf32>
    %5 = arith.addf %1, %3 : vector<2x256xf32>
    %c0_4 = arith.constant 0 : index
    %c2 = arith.constant 2 : index
    %c0_5 = arith.constant 0 : index
    %6 = vector.load %arg3[%c0_4, %c2, %c0_5] : memref<2x4x256xf32, #tpu.memory_space<vmem>>, vector<2x1x256xf32>
    %7 = vector.shape_cast %6 : vector<2x1x256xf32> to vector<2x256xf32>
    %8 = arith.maximumf %4, %7 : vector<2x256xf32>
    %9 = arith.addf %5, %7 : vector<2x256xf32>
    %c0_6 = arith.constant 0 : index
    %c3 = arith.constant 3 : index
    %c0_7 = arith.constant 0 : index
    %10 = vector.load %arg3[%c0_6, %c3, %c0_7] : memref<2x4x256xf32, #tpu.memory_space<vmem>>, vector<2x1x256xf32>
    %11 = vector.shape_cast %10 : vector<2x1x256xf32> to vector<2x256xf32>
    %12 = arith.maximumf %8, %11 : vector<2x256xf32>
    %13 = arith.addf %9, %11 : vector<2x256xf32>
    %cst = arith.constant 2.500000e-01 : f32
    %14 = vector.broadcast %cst : f32 to vector<2x256xf32>
    %15 = arith.mulf %13, %14 : vector<2x256xf32>
    %c0_8 = arith.constant 0 : index
    %16 = memref.load %arg1[%c0_8] : memref<18xf32, #tpu.memory_space<smem>>
    %c1_9 = arith.constant 1 : index
    %17 = memref.load %arg1[%c1_9] : memref<18xf32, #tpu.memory_space<smem>>
    %c2_10 = arith.constant 2 : index
    %18 = memref.load %arg1[%c2_10] : memref<18xf32, #tpu.memory_space<smem>>
    %c3_11 = arith.constant 3 : index
    %19 = memref.load %arg1[%c3_11] : memref<18xf32, #tpu.memory_space<smem>>
    %c4 = arith.constant 4 : index
    %20 = memref.load %arg1[%c4] : memref<18xf32, #tpu.memory_space<smem>>
    %c5 = arith.constant 5 : index
    %21 = memref.load %arg1[%c5] : memref<18xf32, #tpu.memory_space<smem>>
    %c6 = arith.constant 6 : index
    %22 = memref.load %arg1[%c6] : memref<18xf32, #tpu.memory_space<smem>>
    %c7 = arith.constant 7 : index
    %23 = memref.load %arg1[%c7] : memref<18xf32, #tpu.memory_space<smem>>
    %c8 = arith.constant 8 : index
    %24 = memref.load %arg1[%c8] : memref<18xf32, #tpu.memory_space<smem>>
    %c9 = arith.constant 9 : index
    %25 = memref.load %arg1[%c9] : memref<18xf32, #tpu.memory_space<smem>>
    %c10 = arith.constant 10 : index
    %26 = memref.load %arg1[%c10] : memref<18xf32, #tpu.memory_space<smem>>
    %c11 = arith.constant 11 : index
    %27 = memref.load %arg1[%c11] : memref<18xf32, #tpu.memory_space<smem>>
    %c12 = arith.constant 12 : index
    %28 = memref.load %arg1[%c12] : memref<18xf32, #tpu.memory_space<smem>>
    %c13 = arith.constant 13 : index
    %29 = memref.load %arg1[%c13] : memref<18xf32, #tpu.memory_space<smem>>
    %c14 = arith.constant 14 : index
    %30 = memref.load %arg1[%c14] : memref<18xf32, #tpu.memory_space<smem>>
    %c15 = arith.constant 15 : index
    %31 = memref.load %arg1[%c15] : memref<18xf32, #tpu.memory_space<smem>>
    %c16 = arith.constant 16 : index
    %32 = memref.load %arg1[%c16] : memref<18xf32, #tpu.memory_space<smem>>
    %c17 = arith.constant 17 : index
    %33 = memref.load %arg1[%c17] : memref<18xf32, #tpu.memory_space<smem>>
    %34 = vector.broadcast %16 : f32 to vector<2x256xf32>
    %35 = arith.mulf %12, %34 : vector<2x256xf32>
    %36 = vector.broadcast %25 : f32 to vector<2x256xf32>
    %37 = arith.mulf %15, %36 : vector<2x256xf32>
    %38 = arith.addf %35, %37 : vector<2x256xf32>
    %c17_i32 = arith.constant 17 : i32
    %39 = tpu.dynamic_rotate %38 by %c17_i32 dim 1 : vector<2x256xf32>, i32 -> vector<2x256xf32>
    %c0_12 = arith.constant 0 : index
    %c0_13 = arith.constant 0 : index
    %40 = vector.load %arg2[%c0_12, %c0_13] : memref<9x256xf32, #tpu.memory_space<vmem>>, vector<1x256xf32>
    %41 = vector.broadcast %40 : vector<1x256xf32> to vector<2x256xf32>
    %42 = arith.mulf %39, %41 : vector<2x256xf32>
    %43 = vector.broadcast %17 : f32 to vector<2x256xf32>
    %44 = arith.mulf %12, %43 : vector<2x256xf32>
    %45 = vector.broadcast %26 : f32 to vector<2x256xf32>
    %46 = arith.mulf %15, %45 : vector<2x256xf32>
    %47 = arith.addf %44, %46 : vector<2x256xf32>
    %c16_i32 = arith.constant 16 : i32
    %48 = tpu.dynamic_rotate %47 by %c16_i32 dim 1 : vector<2x256xf32>, i32 -> vector<2x256xf32>
    %c1_14 = arith.constant 1 : index
    %c0_15 = arith.constant 0 : index
    %49 = vector.load %arg2[%c1_14, %c0_15] : memref<9x256xf32, #tpu.memory_space<vmem>>, vector<1x256xf32>
    %50 = vector.broadcast %49 : vector<1x256xf32> to vector<2x256xf32>
    %51 = arith.mulf %48, %50 : vector<2x256xf32>
    %52 = arith.addf %42, %51 : vector<2x256xf32>
    %53 = vector.broadcast %18 : f32 to vector<2x256xf32>
    %54 = arith.mulf %12, %53 : vector<2x256xf32>
    %55 = vector.broadcast %27 : f32 to vector<2x256xf32>
    %56 = arith.mulf %15, %55 : vector<2x256xf32>
    %57 = arith.addf %54, %56 : vector<2x256xf32>
    %c15_i32 = arith.constant 15 : i32
    %58 = tpu.dynamic_rotate %57 by %c15_i32 dim 1 : vector<2x256xf32>, i32 -> vector<2x256xf32>
    %c2_16 = arith.constant 2 : index
    %c0_17 = arith.constant 0 : index
    %59 = vector.load %arg2[%c2_16, %c0_17] : memref<9x256xf32, #tpu.memory_space<vmem>>, vector<1x256xf32>
    %60 = vector.broadcast %59 : vector<1x256xf32> to vector<2x256xf32>
    %61 = arith.mulf %58, %60 : vector<2x256xf32>
    %62 = arith.addf %52, %61 : vector<2x256xf32>
    %63 = vector.broadcast %19 : f32 to vector<2x256xf32>
    %64 = arith.mulf %12, %63 : vector<2x256xf32>
    %65 = vector.broadcast %28 : f32 to vector<2x256xf32>
    %66 = arith.mulf %15, %65 : vector<2x256xf32>
    %67 = arith.addf %64, %66 : vector<2x256xf32>
    %c1_i32 = arith.constant 1 : i32
    %68 = tpu.dynamic_rotate %67 by %c1_i32 dim 1 : vector<2x256xf32>, i32 -> vector<2x256xf32>
    %c3_18 = arith.constant 3 : index
    %c0_19 = arith.constant 0 : index
    %69 = vector.load %arg2[%c3_18, %c0_19] : memref<9x256xf32, #tpu.memory_space<vmem>>, vector<1x256xf32>
    %70 = vector.broadcast %69 : vector<1x256xf32> to vector<2x256xf32>
    %71 = arith.mulf %68, %70 : vector<2x256xf32>
    %72 = arith.addf %62, %71 : vector<2x256xf32>
    %73 = vector.broadcast %20 : f32 to vector<2x256xf32>
    %74 = arith.mulf %12, %73 : vector<2x256xf32>
    %75 = vector.broadcast %29 : f32 to vector<2x256xf32>
    %76 = arith.mulf %15, %75 : vector<2x256xf32>
    %77 = arith.addf %74, %76 : vector<2x256xf32>
    %78 = arith.addf %72, %77 : vector<2x256xf32>
    %79 = vector.broadcast %21 : f32 to vector<2x256xf32>
    %80 = arith.mulf %12, %79 : vector<2x256xf32>
    %81 = vector.broadcast %30 : f32 to vector<2x256xf32>
    %82 = arith.mulf %15, %81 : vector<2x256xf32>
    %83 = arith.addf %80, %82 : vector<2x256xf32>
    %c255_i32 = arith.constant 255 : i32
    %84 = tpu.dynamic_rotate %83 by %c255_i32 dim 1 : vector<2x256xf32>, i32 -> vector<2x256xf32>
    %c5_20 = arith.constant 5 : index
    %c0_21 = arith.constant 0 : index
    %85 = vector.load %arg2[%c5_20, %c0_21] : memref<9x256xf32, #tpu.memory_space<vmem>>, vector<1x256xf32>
    %86 = vector.broadcast %85 : vector<1x256xf32> to vector<2x256xf32>
    %87 = arith.mulf %84, %86 : vector<2x256xf32>
    %88 = arith.addf %78, %87 : vector<2x256xf32>
    %89 = vector.broadcast %22 : f32 to vector<2x256xf32>
    %90 = arith.mulf %12, %89 : vector<2x256xf32>
    %91 = vector.broadcast %31 : f32 to vector<2x256xf32>
    %92 = arith.mulf %15, %91 : vector<2x256xf32>
    %93 = arith.addf %90, %92 : vector<2x256xf32>
    %c241_i32 = arith.constant 241 : i32
    %94 = tpu.dynamic_rotate %93 by %c241_i32 dim 1 : vector<2x256xf32>, i32 -> vector<2x256xf32>
    %c6_22 = arith.constant 6 : index
    %c0_23 = arith.constant 0 : index
    %95 = vector.load %arg2[%c6_22, %c0_23] : memref<9x256xf32, #tpu.memory_space<vmem>>, vector<1x256xf32>
    %96 = vector.broadcast %95 : vector<1x256xf32> to vector<2x256xf32>
    %97 = arith.mulf %94, %96 : vector<2x256xf32>
    %98 = arith.addf %88, %97 : vector<2x256xf32>
    %99 = vector.broadcast %23 : f32 to vector<2x256xf32>
    %100 = arith.mulf %12, %99 : vector<2x256xf32>
    %101 = vector.broadcast %32 : f32 to vector<2x256xf32>
    %102 = arith.mulf %15, %101 : vector<2x256xf32>
    %103 = arith.addf %100, %102 : vector<2x256xf32>
    %c240_i32 = arith.constant 240 : i32
    %104 = tpu.dynamic_rotate %103 by %c240_i32 dim 1 : vector<2x256xf32>, i32 -> vector<2x256xf32>
    %c7_24 = arith.constant 7 : index
    %c0_25 = arith.constant 0 : index
    %105 = vector.load %arg2[%c7_24, %c0_25] : memref<9x256xf32, #tpu.memory_space<vmem>>, vector<1x256xf32>
    %106 = vector.broadcast %105 : vector<1x256xf32> to vector<2x256xf32>
    %107 = arith.mulf %104, %106 : vector<2x256xf32>
    %108 = arith.addf %98, %107 : vector<2x256xf32>
    %109 = vector.broadcast %24 : f32 to vector<2x256xf32>
    %110 = arith.mulf %12, %109 : vector<2x256xf32>
    %111 = vector.broadcast %33 : f32 to vector<2x256xf32>
    %112 = arith.mulf %15, %111 : vector<2x256xf32>
    %113 = arith.addf %110, %112 : vector<2x256xf32>
    %c239_i32 = arith.constant 239 : i32
    %114 = tpu.dynamic_rotate %113 by %c239_i32 dim 1 : vector<2x256xf32>, i32 -> vector<2x256xf32>
    %c8_26 = arith.constant 8 : index
    %c0_27 = arith.constant 0 : index
    %115 = vector.load %arg2[%c8_26, %c0_27] : memref<9x256xf32, #tpu.memory_space<vmem>>, vector<1x256xf32>
    %116 = vector.broadcast %115 : vector<1x256xf32> to vector<2x256xf32>
    %117 = arith.mulf %114, %116 : vector<2x256xf32>
    %118 = arith.addf %108, %117 : vector<2x256xf32>
    %119 = arith.negf %118 : vector<2x256xf32>
    %120 = math.exp %119 : vector<2x256xf32>
    %cst_28 = arith.constant 1.000000e+00 : f32
    %121 = vector.broadcast %cst_28 : f32 to vector<2x256xf32>
    %122 = arith.addf %121, %120 : vector<2x256xf32>
    %123 = arith.divf %121, %122 : vector<2x256xf32>
    %c0_29 = arith.constant 0 : index
    %c0_30 = arith.constant 0 : index
    %c0_31 = arith.constant 0 : index
    %124 = vector.load %arg3[%c0_29, %c0_30, %c0_31] : memref<2x4x256xf32, #tpu.memory_space<vmem>>, vector<2x4x256xf32>
    %125 = vector.shape_cast %123 : vector<2x256xf32> to vector<2x1x256xf32>
    %126 = vector.broadcast %125 : vector<2x1x256xf32> to vector<2x4x256xf32>
    %127 = arith.mulf %124, %126 : vector<2x4x256xf32>
    %c0_32 = arith.constant 0 : index
    %c0_33 = arith.constant 0 : index
    %c0_34 = arith.constant 0 : index
    %128 = vector.load %arg4[%c0_32, %c0_33, %c0_34] : memref<2x4x256xf32, #tpu.memory_space<vmem>>, vector<2x4x256xf32>
    tpu.vector_store %arg4[%c0_32, %c0_33, %c0_34], %127 {strides = array<i32>} : memref<2x4x256xf32, #tpu.memory_space<vmem>>, vector<2x4x256xf32>,
    return
  }
  func.func @transform_0(%arg0: i32) -> i32 {
    %c0_i32 = arith.constant 0 : i32
    %c0_i32_0 = arith.constant 0 : i32
    return %c0_i32 : i32
  }
  func.func @transform_1(%arg0: i32) -> (i32, i32) {
    %c0_i32 = arith.constant 0 : i32
    %c0_i32_0 = arith.constant 0 : i32
    %c0_i32_1 = arith.constant 0 : i32
    return %c0_i32, %c0_i32_0 : i32, i32
  }
  func.func @transform_2(%arg0: i32) -> (i32, i32, i32) {
    %c0_i32 = arith.constant 0 : i32
    %c0_i32_0 = arith.constant 0 : i32
    %c0_i32_1 = arith.constant 0 : i32
    return %arg0, %c0_i32, %c0_i32_0 : i32, i32, i32
  }
  func.func @transform_3(%arg0: i32) -> (i32, i32, i32) {
    %c0_i32 = arith.constant 0 : i32
    %c0_i32_0 = arith.constant 0 : i32
    %c0_i32_1 = arith.constant 0 : i32
    return %arg0, %c0_i32, %c0_i32_0 : i32, i32, i32
  }
}

</mosaic_0001>

<llo_original>
// kernel: tpu_custom_call.1
$region0: #{tpu_custom_call.1}
  #allocation0 [shape = 'u32[]', space=smem, size = 0x4, offset = 0x4, fixed_abs, tag = 'smem constant byte address 0x4 - core index']
  #allocation1 [shape = 'u32[72,128]{1,0:T(1,128)}', space=vmem, size = 0x9000, scoped, tag = 'internal scratch']
  %s0 = inlined_call_operand.hbm [shape: f32[18], index: 0, kind: input, shape index: {}]
  %s1 = inlined_call_operand.hbm [shape: f32[9,256], index: 1, kind: input, shape index: {}]
  %s2 = inlined_call_operand.hbm [shape: f32[2,4,256], index: 2, kind: input, shape index: {}]
  %s3 = inlined_call_operand.hbm [shape: f32[2,4,256], index: 3, kind: output, shape index: {}]
  %s4 = sld [smem:[#allocation0]]
  $region34: #{tpu_custom_call.1} parent=0
    _
  %s6 = ssub.s32 1, %s4
  %s7 = scalar_select 0, %s6, %s4
  $region1: #{tpu_custom_call.1} parent=0
    #allocation2 [shape = 'u8[512]{0}', space=smem, size = 0x200, scoped, tag = 'input window, operand 0, single buffered']
    #allocation3 [shape = 's32[1]{0}', space=sflag, size = 0x4, scoped, tag = 'scoped memory for tpu_custom_call.1']
    #allocation4 [shape = 's32[1]{0}', space=sflag, size = 0x4, scoped, tag = 'scoped memory for tpu_custom_call.1']
    #allocation5 [shape = 's32[1]{0}', space=sflag, size = 0x4, scoped, tag = 'scoped memory for tpu_custom_call.1']
    #allocation6 [shape = 'u8[16384]{0}', space=vmem, size = 0x4000, scoped, tag = 'input window, operand 1, single buffered']
    #allocation7 [shape = 'u8[8192]{0}', space=vmem, size = 0x2000, scoped, tag = 'input window, operand 2, single buffered']
    #allocation8 [shape = 's32[1]{0}', space=sflag, size = 0x4, scoped, tag = 'scoped memory for tpu_custom_call.1']
    #allocation9 [shape = 'u8[8192]{0}', space=vmem, size = 0x2000, scoped, tag = 'output window, operand 0, single buffered']
    %8 = vsyncpa [#allocation5], 0
    %9 = vsyncpa [#allocation3], 0
    %10 = vsyncpa [#allocation8], 0
    %11 = vsyncpa [#allocation4], 0
    // Predicated region
    $region2: #{tpu_custom_call.1} parent=1 // pred_check
      _
    $region3: #{tpu_custom_call.1} parent=1 // pred_check_branch
      %13 = sbr.rel (0) target = $region5
    $region4: #{tpu_custom_call.1} parent=1 // pred_region
      %15 = vsyncadd [#allocation5], 0
      %s17 = sshll.u32 %s0, 4
      %s18 = int_to_ptr.hbm [resolvable:$true] %s17
      %20 = dma.hbm_to_smem %s18, 16, [#allocation2], [#allocation5]
    $region5: #{tpu_custom_call.1} parent=1 // pred_fallthru
      _
    // Predicated region
    $region6: #{tpu_custom_call.1} parent=1 // pred_check
      _
    $region7: #{tpu_custom_call.1} parent=1 // pred_check_branch
      %22 = sbr.rel (0) target = $region9
    $region8: #{tpu_custom_call.1} parent=1 // pred_region
      %24 = vsyncadd [#allocation3], 0
      %s25 = sshll.u32 %s1, 4
      %s26 = int_to_ptr.hbm [resolvable:$true] %s25
      %s27 = sshll.u32 [#allocation6], 4
      %s28 = int_to_ptr.vmem [resolvable:$true] %s27
      %33 = dma.hbm_to_vmem [thread:$0]  %s26, 512, %s28, [#allocation3], 256, 256, 16
    $region9: #{tpu_custom_call.1} parent=1 // pred_fallthru
      _
    // Predicated region
    $region10: #{tpu_custom_call.1} parent=1 // pred_check
      _
    $region11: #{tpu_custom_call.1} parent=1 // pred_check_branch
      %35 = sbr.rel (0) target = $region13
    $region12: #{tpu_custom_call.1} parent=1 // pred_region
      %37 = vsyncadd [#allocation8], 0
      %s38 = sshll.u32 %s2, 4
      %s39 = int_to_ptr.hbm [resolvable:$true] %s38
      %s40 = sshll.u32 [#allocation7], 4
      %s41 = int_to_ptr.vmem [resolvable:$true] %s40
      %46 = dma.hbm_to_vmem [thread:$0]  %s39, 256, %s41, [#allocation8], 128, 128, 8
    $region13: #{tpu_custom_call.1} parent=1 // pred_fallthru
      _
    // Predicated region
    $region14: #{tpu_custom_call.1} parent=1 // pred_check
      _
    $region15: #{tpu_custom_call.1} parent=1 // pred_check_branch
      %48 = sbr.rel (0) target = $region17
    $region16: #{tpu_custom_call.1} parent=1 // pred_region
      %50 = dma.done [#allocation5], 16
    $region17: #{tpu_custom_call.1} parent=1 // pred_fallthru
      _
    // Predicated region
    $region18: #{tpu_custom_call.1} parent=1 // pred_check
      _
    $region19: #{tpu_custom_call.1} parent=1 // pred_check_branch
      %52 = sbr.rel (0) target = $region21
    $region20: #{tpu_custom_call.1} parent=1 // pred_region
      %54 = dma.done [#allocation3], 512
    $region21: #{tpu_custom_call.1} parent=1 // pred_fallthru
      _
    // Predicated region
    $region22: #{tpu_custom_call.1} parent=1 // pred_check
      _
    $region23: #{tpu_custom_call.1} parent=1 // pred_check_branch
      %56 = sbr.rel (0) target = $region25
    $region24: #{tpu_custom_call.1} parent=1 // pred_region
      %58 = dma.done [#allocation8], 256
    $region25: #{tpu_custom_call.1} parent=1 // pred_fallthru
      _
    %59 = sfence
    %v60 = vld [vmem:[#allocation7] ss:$4 sm:$0x3]
    %s61 = scalar_lea.vmem [#allocation7], 8
    %v62 = vld [vmem:[%s61] ss:$4 sm:$0x3]
    %s63 = scalar_lea.vmem [#allocation7], 1
    %v64 = vld [vmem:[%s63] ss:$4 sm:$0x3]
    %s65 = scalar_lea.vmem [#allocation7], 9
    %v66 = vld [vmem:[%s65] ss:$4 sm:$0x3]
    %v67 = vmax.f32 %v60, %v64
    %v68 = vmax.f32 %v62, %v66
    %v69 = vadd.f32 %v60, %v64
    %v70 = vadd.f32 %v62, %v66
    %s71 = scalar_lea.vmem [#allocation7], 2
    %v72 = vld [vmem:[%s71] ss:$4 sm:$0x3]
    %s73 = scalar_lea.vmem [#allocation7], 10
    %v74 = vld [vmem:[%s73] ss:$4 sm:$0x3]
    %v75 = vmax.f32 %v67, %v72
    %v76 = vmax.f32 %v68, %v74
    %v77 = vadd.f32 %v69, %v72
    %v78 = vadd.f32 %v70, %v74
    %s79 = scalar_lea.vmem [#allocation7], 3
    %v80 = vld [vmem:[%s79] ss:$4 sm:$0x3]
    %s81 = scalar_lea.vmem [#allocation7], 11
    %v82 = vld [vmem:[%s81] ss:$4 sm:$0x3]
    %v83 = vmax.f32 %v75, %v80
    %v84 = vmax.f32 %v76, %v82
    %v85 = vadd.f32 %v77, %v80
    %v86 = vadd.f32 %v78, %v82
    %v87 = vmul.f32 %v85, 0.25
    %v88 = vmul.f32 %v86, 0.25
    %s89 = sld [smem:[#allocation2]]
    %s90 = sld [smem:[#allocation2 + $0x1]]
    %s91 = sld [smem:[#allocation2 + $0x2]]
    %s92 = sld [smem:[#allocation2 + $0x3]]
    %s93 = sld [smem:[#allocation2 + $0x4]]
    %s94 = sld [smem:[#allocation2 + $0x5]]
    %s95 = sld [smem:[#allocation2 + $0x6]]
    %s96 = sld [smem:[#allocation2 + $0x7]]
    %s97 = sld [smem:[#allocation2 + $0x8]]
    %s98 = sld [smem:[#allocation2 + $0x9]]
    %s99 = sld [smem:[#allocation2 + $0xa]]
    %s100 = sld [smem:[#allocation2 + $0xb]]
    %s101 = sld [smem:[#allocation2 + $0xc]]
    %s102 = sld [smem:[#allocation2 + $0xd]]
    %s103 = sld [smem:[#allocation2 + $0xe]]
    %s104 = sld [smem:[#allocation2 + $0xf]]
    %s105 = sld [smem:[#allocation2 + $0x10]]
    %s106 = sld [smem:[#allocation2 + $0x11]]
    %v107 = vstv %s89
    %v108 = vmul.f32 %v83, %v107
    %v109 = vmul.f32 %v84, %v107
    %v110 = vstv %s98
    %v111 = vmul.f32 %v87, %v110
    %v112 = vmul.f32 %v88, %v110
    %v113 = vadd.f32 %v108, %v111
    %v114 = vadd.f32 %v109, %v112
    %117 = vst [vmem:[#allocation1] ss:$9 sm:$0xff] %v113
    %s118 = scalar_lea.vmem [#allocation1], 1
    %119 = vst [vmem:[%s118] ss:$9 sm:$0xff] %v114
    %v120 = vld [vmem:[#allocation1] sm:$0xff]
    %v121 = vld [vmem:[#allocation1 + $0x9] sm:$0xff]
    %124 = vrot.lane.b32.xlu0 %v120, 17
    %v125 = vpop.permute.xlu0 %124
    %126 = vrot.lane.b32.xlu0 %v121, 17
    %v127 = vpop.permute.xlu0 %126
    %v128 = vlaneseq
    %v129 = vand.u32 %v128, 127
    %vm130 = vcmp.lt.s32.totalorder %v129, 17
    %v131 = vsel %vm130, %v125, %v127
    %v132 = vsel %vm130, %v127, %v125
    %v133 = vld [vmem:[#allocation6] ss:$8 sm:$0x3]
    %v135 = vperm.slane %v133, 0
    %v136 = vperm.slane %v133, 1
    %v139 = vmul.f32 %v132, %v135
    %v140 = vmul.f32 %v131, %v136
    %v141 = vstv %s90
    %v142 = vmul.f32 %v83, %v141
    %v143 = vmul.f32 %v84, %v141
    %v144 = vstv %s99
    %v145 = vmul.f32 %v87, %v144
    %v146 = vmul.f32 %v88, %v144
    %v147 = vadd.f32 %v142, %v145
    %v148 = vadd.f32 %v143, %v146
    %151 = vst [vmem:[#allocation1] ss:$9 sm:$0xff] %v147
    %s152 = scalar_lea.vmem [#allocation1], 1
    %153 = vst [vmem:[%s152] ss:$9 sm:$0xff] %v148
    %v154 = vld [vmem:[#allocation1] sm:$0xff]
    %v155 = vld [vmem:[#allocation1 + $0x9] sm:$0xff]
    %158 = vrot.lane.b32.xlu0 %v154, 16
    %v159 = vpop.permute.xlu0 %158
    %160 = vrot.lane.b32.xlu0 %v155, 16
    %v161 = vpop.permute.xlu0 %160
    %vm162 = vcmp.lt.s32.totalorder %v129, 16
    %v163 = vsel %vm162, %v159, %v161
    %v164 = vsel %vm162, %v161, %v159
    %s165 = scalar_lea.vmem [#allocation6], 1
    %v166 = vld [vmem:[%s165] ss:$8 sm:$0x3]
    %v168 = vperm.slane %v166, 0
    %v169 = vperm.slane %v166, 1
    %v172 = vmul.f32 %v164, %v168
    %v173 = vmul.f32 %v163, %v169
    %v174 = vadd.f32 %v139, %v172
    %v175 = vadd.f32 %v140, %v173
    %v176 = vstv %s91
    %v177 = vmul.f32 %v83, %v176
    %v178 = vmul.f32 %v84, %v176
    %v179 = vstv %s100
    %v180 = vmul.f32 %v87, %v179
    %v181 = vmul.f32 %v88, %v179
    %v182 = vadd.f32 %v177, %v180
    %v183 = vadd.f32 %v178, %v181
    %186 = vst [vmem:[#allocation1] ss:$9 sm:$0xff] %v182
    %s187 = scalar_lea.vmem [#allocation1], 1
    %188 = vst [vmem:[%s187] ss:$9 sm:$0xff] %v183
    %v189 = vld [vmem:[#allocation1] sm:$0xff]
    %v190 = vld [vmem:[#allocation1 + $0x9] sm:$0xff]
    %193 = vrot.lane.b32.xlu0 %v189, 15
    %v194 = vpop.permute.xlu0 %193
    %195 = vrot.lane.b32.xlu0 %v190, 15
    %v196 = vpop.permute.xlu0 %195
    %vm197 = vcmp.lt.s32.totalorder %v129, 15
    %v198 = vsel %vm197, %v194, %v196
    %v199 = vsel %vm197, %v196, %v194
    %s200 = scalar_lea.vmem [#allocation6], 2
    %v201 = vld [vmem:[%s200] ss:$8 sm:$0x3]
    %v203 = vperm.slane %v201, 0
    %v204 = vperm.slane %v201, 1
    %v207 = vmul.f32 %v199, %v203
    %v208 = vmul.f32 %v198, %v204
    %v209 = vadd.f32 %v174, %v207
    %v210 = vadd.f32 %v175, %v208
    %v211 = vstv %s92
    %v212 = vmul.f32 %v83, %v211
    %v213 = vmul.f32 %v84, %v211
    %v214 = vstv %s101
    %v215 = vmul.f32 %v87, %v214
    %v216 = vmul.f32 %v88, %v214
    %v217 = vadd.f32 %v212, %v215
    %v218 = vadd.f32 %v213, %v216
    %221 = vst [vmem:[#allocation1] ss:$9 sm:$0xff] %v217
    %s222 = scalar_lea.vmem [#allocation1], 1
    %223 = vst [vmem:[%s222] ss:$9 sm:$0xff] %v218
    %v224 = vld [vmem:[#allocation1] sm:$0xff]
    %v225 = vld [vmem:[#allocation1 + $0x9] sm:$0xff]
    %228 = vrot.lane.b32.xlu0 %v224, 1
    %v229 = vpop.permute.xlu0 %228
    %230 = vrot.lane.b32.xlu0 %v225, 1
    %v231 = vpop.permute.xlu0 %230
    %vm232 = vcmp.lt.s32.totalorder %v129, 1
    %v233 = vsel %vm232, %v229, %v231
    %v234 = vsel %vm232, %v231, %v229
    %s235 = scalar_lea.vmem [#allocation6], 3
    %v236 = vld [vmem:[%s235] ss:$8 sm:$0x3]
    %v238 = vperm.slane %v236, 0
    %v239 = vperm.slane %v236, 1
    %v242 = vmul.f32 %v234, %v238
    %v243 = vmul.f32 %v233, %v239
    %v244 = vadd.f32 %v209, %v242
    %v245 = vadd.f32 %v210, %v243
    %v246 = vstv %s93
    %v247 = vmul.f32 %v83, %v246
    %v248 = vmul.f32 %v84, %v246
    %v249 = vstv %s102
    %v250 = vmul.f32 %v87, %v249
    %v251 = vmul.f32 %v88, %v249
    %v252 = vadd.f32 %v247, %v250
    %v253 = vadd.f32 %v248, %v251
    %256 = vst [vmem:[#allocation1] ss:$9 sm:$0xff] %v252
    %s257 = scalar_lea.vmem [#allocation1], 1
    %258 = vst [vmem:[%s257] ss:$9 sm:$0xff] %v253
    %v259 = vld [vmem:[#allocation1] sm:$0xff]
    %v260 = vld [vmem:[#allocation1 + $0x9] sm:$0xff]
    %v263 = vadd.f32 %v244, %v259
    %v264 = vadd.f32 %v245, %v260
    %v265 = vstv %s94
    %v266 = vmul.f32 %v83, %v265
    %v267 = vmul.f32 %v84, %v265
    %v268 = vstv %s103
    %v269 = vmul.f32 %v87, %v268
    %v270 = vmul.f32 %v88, %v268
    %v271 = vadd.f32 %v266, %v269
    %v272 = vadd.f32 %v267, %v270
    %275 = vst [vmem:[#allocation1] ss:$9 sm:$0xff] %v271
    %s276 = scalar_lea.vmem [#allocation1], 1
    %277 = vst [vmem:[%s276] ss:$9 sm:$0xff] %v272
    %v278 = vld [vmem:[#allocation1] sm:$0xff]
    %v279 = vld [vmem:[#allocation1 + $0x9] sm:$0xff]
    %282 = vrot.lane.b32.xlu0 %v278, 127
    %v283 = vpop.permute.xlu0 %282
    %284 = vrot.lane.b32.xlu0 %v279, 127
    %v285 = vpop.permute.xlu0 %284
    %vm286 = vcmp.lt.s32.totalorder %v129, 127
    %v287 = vsel %vm286, %v283, %v285
    %v288 = vsel %vm286, %v285, %v283
    %s289 = scalar_lea.vmem [#allocation6], 5
    %v290 = vld [vmem:[%s289] ss:$8 sm:$0x3]
    %v292 = vperm.slane %v290, 0
    %v293 = vperm.slane %v290, 1
    %v296 = vmul.f32 %v287, %v292
    %v297 = vmul.f32 %v288, %v293
    %v298 = vadd.f32 %v263, %v296
    %v299 = vadd.f32 %v264, %v297
    %v300 = vstv %s95
    %v301 = vmul.f32 %v83, %v300
    %v302 = vmul.f32 %v84, %v300
    %v303 = vstv %s104
    %v304 = vmul.f32 %v87, %v303
    %v305 = vmul.f32 %v88, %v303
    %v306 = vadd.f32 %v301, %v304
    %v307 = vadd.f32 %v302, %v305
    %310 = vst [vmem:[#allocation1] ss:$9 sm:$0xff] %v306
    %s311 = scalar_lea.vmem [#allocation1], 1
    %312 = vst [vmem:[%s311] ss:$9 sm:$0xff] %v307
    %v313 = vld [vmem:[#allocation1] sm:$0xff]
    %v314 = vld [vmem:[#allocation1 + $0x9] sm:$0xff]
    %317 = vrot.lane.b32.xlu0 %v313, 113
    %v318 = vpop.permute.xlu0 %317
    %319 = vrot.lane.b32.xlu0 %v314, 113
    %v320 = vpop.permute.xlu0 %319
    %vm321 = vcmp.lt.s32.totalorder %v129, 113
    %v322 = vsel %vm321, %v318, %v320
    %v323 = vsel %vm321, %v320, %v318
    %s324 = scalar_lea.vmem [#allocation6], 6
    %v325 = vld [vmem:[%s324] ss:$8 sm:$0x3]
    %v327 = vperm.slane %v325, 0
    %v328 = vperm.slane %v325, 1
    %v331 = vmul.f32 %v322, %v327
    %v332 = vmul.f32 %v323, %v328
    %v333 = vadd.f32 %v298, %v331
    %v334 = vadd.f32 %v299, %v332
    %v335 = vstv %s96
    %v336 = vmul.f32 %v83, %v335
    %v337 = vmul.f32 %v84, %v335
    %v338 = vstv %s105
    %v339 = vmul.f32 %v87, %v338
    %v340 = vmul.f32 %v88, %v338
    %v341 = vadd.f32 %v336, %v339
    %v342 = vadd.f32 %v337, %v340
    %345 = vst [vmem:[#allocation1] ss:$9 sm:$0xff] %v341
    %s346 = scalar_lea.vmem [#allocation1], 1
    %347 = vst [vmem:[%s346] ss:$9 sm:$0xff] %v342
    %v348 = vld [vmem:[#allocation1] sm:$0xff]
    %v349 = vld [vmem:[#allocation1 + $0x9] sm:$0xff]
    %352 = vrot.lane.b32.xlu0 %v348, 112
    %v353 = vpop.permute.xlu0 %352
    %354 = vrot.lane.b32.xlu0 %v349, 112
    %v355 = vpop.permute.xlu0 %354
    %vm356 = vcmp.lt.s32.totalorder %v129, 112
    %v357 = vsel %vm356, %v353, %v355
    %v358 = vsel %vm356, %v355, %v353
    %s359 = scalar_lea.vmem [#allocation6], 7
    %v360 = vld [vmem:[%s359] ss:$8 sm:$0x3]
    %v362 = vperm.slane %v360, 0
    %v363 = vperm.slane %v360, 1
    %v366 = vmul.f32 %v357, %v362
    %v367 = vmul.f32 %v358, %v363
    %v368 = vadd.f32 %v333, %v366
    %v369 = vadd.f32 %v334, %v367
    %v370 = vstv %s97
    %v371 = vmul.f32 %v83, %v370
    %v372 = vmul.f32 %v84, %v370
    %v373 = vstv %s106
    %v374 = vmul.f32 %v87, %v373
    %v375 = vmul.f32 %v88, %v373
    %v376 = vadd.f32 %v371, %v374
    %v377 = vadd.f32 %v372, %v375
    %380 = vst [vmem:[#allocation1] ss:$9 sm:$0xff] %v376
    %s381 = scalar_lea.vmem [#allocation1], 1
    %382 = vst [vmem:[%s381] ss:$9 sm:$0xff] %v377
    %v383 = vld [vmem:[#allocation1] sm:$0xff]
    %v384 = vld [vmem:[#allocation1 + $0x9] sm:$0xff]
    %387 = vrot.lane.b32.xlu0 %v383, 111
    %v388 = vpop.permute.xlu0 %387
    %389 = vrot.lane.b32.xlu0 %v384, 111
    %v390 = vpop.permute.xlu0 %389
    %vm391 = vcmp.lt.s32.totalorder %v129, 111
    %v392 = vsel %vm391, %v388, %v390
    %v393 = vsel %vm391, %v390, %v388
    %s394 = scalar_lea.vmem [#allocation6], 16
    %v395 = vld [vmem:[%s394] ss:$8 sm:$0x3]
    %v397 = vperm.slane %v395, 0
    %v398 = vperm.slane %v395, 1
    %v401 = vmul.f32 %v392, %v397
    %v402 = vmul.f32 %v393, %v398
    %v403 = vadd.f32 %v368, %v401
    %v404 = vadd.f32 %v369, %v402
    %v405 = vxor.u32 %v403, 2147483648
    %v406 = vxor.u32 %v404, 2147483648
    %v407 = vmul.f32 %v405, 1.442695
    %v408 = vpow.pop %v407
    %v409 = vmul.f32 %v406, 1.442695
    %v410 = vpow.pop %v409
    %v411 = vadd.f32 %v408, 1.0
    %v412 = vadd.f32 %v410, 1.0
    %v413 = vrcp.pop %v411
    %v414 = vmul.f32 %v411, %v413
    %v415 = vsub.f32 1.0, %v414
    %v416 = vmul.f32 %v413, %v415
    %v417 = vadd.f32 %v413, %v416
    %vm418 = vweird.f32 %v411
    %vm419 = vweird.f32 %v413
    %vm420 = vmor %vm418, %vm419
    %v421 = vsel %vm420, %v413, %v417
    %v422 = vand.u32 2147483647, %v411
    %vm423 = vcmp.eq.f32.partialorder %v422, 8.507059e+37
    %v424 = vand.u32 %v411, 2147483648
    %v425 = vor.u32 1.1754944e-38, %v424
    %v426 = vsel %vm423, %v425, %v421
    %v427 = vmul.f32 1.0, %v426
    %v428 = vrcp.pop %v412
    %v429 = vmul.f32 %v412, %v428
    %v430 = vsub.f32 1.0, %v429
    %v431 = vmul.f32 %v428, %v430
    %v432 = vadd.f32 %v428, %v431
    %vm433 = vweird.f32 %v412
    %vm434 = vweird.f32 %v428
    %vm435 = vmor %vm433, %vm434
    %v436 = vsel %vm435, %v428, %v432
    %v437 = vand.u32 2147483647, %v412
    %vm438 = vcmp.eq.f32.partialorder %v437, 8.507059e+37
    %v439 = vand.u32 %v412, 2147483648
    %v440 = vor.u32 1.1754944e-38, %v439
    %v441 = vsel %vm438, %v440, %v436
    %v442 = vmul.f32 1.0, %v441
    %v443 = vld [vmem:[#allocation7] sm:$0xff]
    %v444 = vld [vmem:[#allocation7 + $0x8] sm:$0xff]
    %v447 = vrot.slane %v442, 7
    %vm448 = vcmask 1040384
    %v449 = vsel %vm448, %v427, %v447
    %vm450 = vcmask 1041409
    %v451 = vsel %vm450, %v427, %v447
    %v452 = vrot.slane %v451, 1
    %v453 = vperm.slane %v449, 0
    %v454 = vperm.slane %v449, 1
    %v455 = vperm.slane %v452, 0
    %v456 = vperm.slane %v452, 1
    %v457 = vrot.slane %v454, 4
    %v458 = vrot.slane %v456, 4
    %vm459 = vcmask 1043456
    %v460 = vsel %vm459, %v453, %v457
    %v461 = vsel %vm459, %v455, %v458
    %v464 = vmul.f32 %v443, %v460
    %v465 = vmul.f32 %v444, %v461
    %466 = vst [vmem:[#allocation9] sm:$0xff] %v464
    %467 = vst [vmem:[#allocation9 + $0x8] sm:$0xff] %v465
    // Predicated region
    $region26: #{tpu_custom_call.1} parent=1 // pred_check
      _
    $region27: #{tpu_custom_call.1} parent=1 // pred_check_branch
      %469 = sbr.rel (0) target = $region29
    $region28: #{tpu_custom_call.1} parent=1 // pred_region
      %471 = vsyncadd [#allocation4], 0
      %s472 = sshll.u32 [#allocation9], 4
      %s473 = int_to_ptr.vmem [resolvable:$true] %s472
      %s474 = sshll.u32 %s3, 4
      %s475 = int_to_ptr.hbm [resolvable:$true] %s474
      %480 = dma.vmem_to_hbm [thread:$0]  %s473, 256, %s475, [#allocation4], 128, 128, 8
    $region29: #{tpu_custom_call.1} parent=1 // pred_fallthru
      _
    // Predicated region
    $region30: #{tpu_custom_call.1} parent=1 // pred_check
      _
    $region31: #{tpu_custom_call.1} parent=1 // pred_check_branch
      %482 = sbr.rel (0) target = $region33
    $region32: #{tpu_custom_call.1} parent=1 // pred_region
      %484 = dma.done [#allocation4], 256
    $region33: #{tpu_custom_call.1} parent=1 // pred_fallthru
      _
    %485 = vsyncpa [#allocation3], 1
    %486 = vsyncpa [#allocation8], 1
    %487 = vsyncpa [#allocation4], 1
    %488 = vsyncpa [#allocation5], 1

</llo_original>
